<compile_context>
chip_gen: v6e
topology: v6e:2x2x1
jax: 0.10.0
libtpu: 0.0.40
codegen_flags: <defaults>
</compile_context>

<pallas_src>
import functools

import jax
import jax.numpy as jnp
from jax.experimental import pallas as pl
from jax.experimental.pallas import tpu as pltpu


# ---------------------------------------------------------------------------
# Kernel
# ---------------------------------------------------------------------------
def _r_to_z_kernel(r_ref, w1_ref, b1_ref, w2_ref, b2_ref, wh_ref, bh_ref,
                   out_ref, *, z_dim):
    x = r_ref[...].astype(jnp.float32)                                # (Bt, agg_dim)

    h = jnp.dot(x, w1_ref[...], preferred_element_type=jnp.float32) + b1_ref[...]
    h = jnp.maximum(h, 0.0)                                           # ReLU (VPU)
    h = jnp.dot(h, w2_ref[...], preferred_element_type=jnp.float32) + b2_ref[...]
    h = jnp.maximum(h, 0.0)                                           # ReLU (VPU)

    # Fused heads: one MXU push produces [mu_logits | sigma_logits].
    heads = jnp.dot(h, wh_ref[...], preferred_element_type=jnp.float32) + bh_ref[...]

    # sigma transform on the whole tile (EUP sigmoid is per-lane, ~free), then
    # select per-column: cols < z_dim are mu, cols >= z_dim are sigma.
    sig = 0.1 + 0.9 * jax.nn.sigmoid(heads)
    col = jax.lax.broadcasted_iota(jnp.int32, heads.shape, 1)
    out = jnp.where(col < z_dim, heads, sig)

    out_ref[...] = out.astype(out_ref.dtype)


# ---------------------------------------------------------------------------
# Wrapper
# ---------------------------------------------------------------------------
_B_TILE = 128  # rows per grid step on the batched path


def _cost_estimate(B, agg_dim, h_dim, z_dim):
    flops = 2 * B * (agg_dim * h_dim + h_dim * h_dim + h_dim * 2 * z_dim)
    bytes_accessed = 4 * (B * agg_dim                                 # r
                          + agg_dim * h_dim + h_dim                   # W1, b1
                          + h_dim * h_dim + h_dim                     # W2, b2
                          + h_dim * 2 * z_dim + 2 * z_dim             # fused heads
                          + B * 2 * z_dim)                            # output
    return pl.CostEstimate(flops=flops,
                           transcendentals=B * 2 * z_dim,             # sigmoid
                           bytes_accessed=bytes_accessed)


def r_to_z_forward(params, r):
    """Equivalent of r_to_z.forward; returns (mu, sigma) of the Normal."""
    single = (r.ndim == 1)
    if single:
        r = r[None, :]
    B, agg_dim = r.shape
    h_dim = params["w1"].shape[1]
    z_dim = params["w_mu"].shape[1]

    # Fuse the two head projections into one (h_dim, 2*z_dim) weight / bias.
    w_heads = jnp.concatenate([params["w_mu"], params["w_sigma"]], axis=1)
    b_heads = jnp.concatenate([params["b_mu"], params["b_sigma"]], axis=1)

    operands = (r, params["w1"], params["b1"], params["w2"], params["b2"],
                w_heads, b_heads)
    kernel = functools.partial(_r_to_z_kernel, z_dim=z_dim)
    out_dtype = jnp.float32
    out_cols = 2 * z_dim

    if B <= _B_TILE:
        # Small-batch / single-vector path: no grid, no pipelining machinery;
        # every operand is a full VMEM-resident block (total working set is KiB).
        vmem = pl.BlockSpec(memory_space=pltpu.MemorySpace.VMEM)
        out = pl.pallas_call(
            kernel,
            out_shape=jax.ShapeDtypeStruct((B, out_cols), out_dtype),
            in_specs=[vmem] * len(operands),
            out_specs=vmem,
            cost_estimate=_cost_estimate(B, agg_dim, h_dim, z_dim),
        )(*operands)
    else:
        # Batched path: grid over B in 128-row tiles ("parallel" => megacore /
        # v7x dual-TC sharding); weights use a constant index_map so they stay
        # resident in VMEM across all grid steps - only r and out are streamed.
        Bp = ((B + _B_TILE - 1) // _B_TILE) * _B_TILE
        r_padded = jnp.pad(r, ((0, Bp - B), (0, 0))) if Bp != B else r
        operands = (r_padded,) + operands[1:]

        row_spec = pl.BlockSpec((_B_TILE, agg_dim), lambda i: (i, 0))
        out_spec = pl.BlockSpec((_B_TILE, out_cols), lambda i: (i, 0))

        def _resident(a):
            return pl.BlockSpec(a.shape, lambda i: (0, 0))

        out = pl.pallas_call(
            kernel,
            out_shape=jax.ShapeDtypeStruct((Bp, out_cols), out_dtype),
            grid_spec=pltpu.PrefetchScalarGridSpec(
                num_scalar_prefetch=0,
                grid=(Bp // _B_TILE,),
                in_specs=[row_spec] + [_resident(a) for a in operands[1:]],
                out_specs=out_spec),
            compiler_params=pltpu.CompilerParams(
                dimension_semantics=("parallel",)),
            cost_estimate=_cost_estimate(Bp, agg_dim, h_dim, z_dim),
        )(*operands)
        if Bp != B:
            out = out[:B]

    mu, sigma = out[:, :z_dim], out[:, z_dim:]
    if single:
        return mu[0], sigma[0]
    return mu, sigma


# ---------------------------------------------------------------------------
# Deterministic parameter init (mirrors nn.Linear; weights stored (in, out))
# ---------------------------------------------------------------------------
def init_params(key, agg_dim, h_dim, z_dim):
    ks = jax.random.split(key, 8)

    def lin_w(k, fan_in, fan_out):
        bound = 1.0 / (fan_in ** 0.5)
        return jax.random.uniform(k, (fan_in, fan_out), jnp.float32, -bound, bound)

    def lin_b(k, fan_in, fan_out):
        bound = 1.0 / (fan_in ** 0.5)
        return jax.random.uniform(k, (1, fan_out), jnp.float32, -bound, bound)

    return dict(
        w1=lin_w(ks[0], agg_dim, h_dim),      b1=lin_b(ks[1], agg_dim, h_dim),
        w2=lin_w(ks[2], h_dim, h_dim),        b2=lin_b(ks[3], h_dim, h_dim),
        w_mu=lin_w(ks[4], h_dim, z_dim),      b_mu=lin_b(ks[5], h_dim, z_dim),
        w_sigma=lin_w(ks[6], h_dim, z_dim),   b_sigma=lin_b(ks[7], h_dim, z_dim),
    )


# ---------------------------------------------------------------------------
# Pure-JAX reference (mirrors the PyTorch forward) for verification
# ---------------------------------------------------------------------------
def reference_forward(params, r):
    h = jax.nn.relu(r @ params["w1"] + params["b1"][0])
    h = jax.nn.relu(h @ params["w2"] + params["b2"][0])
    mu = h @ params["w_mu"] + params["b_mu"][0]
    sigma = 0.1 + 0.9 * jax.nn.sigmoid(h @ params["w_sigma"] + params["b_sigma"][0])
    return mu, sigma


# ---------------------------------------------------------------------------
if __name__ == "__main__":
    # TODO(synk): torch.distributions.Normal has no Pallas equivalent; the
    # kernel returns (mu, sigma) that parameterize it.
    config = {
        "r_dim": 32,
        "aggregators": ["mean", "max", "min", "logsumexp"],
        "r_to_z_h_dim": 128,
        "z_dim": 32,
    }
    agg_dim = config["r_dim"] * len(config["aggregators"])   # 128 (lane-dense)
    h_dim = config["r_to_z_h_dim"]
    z_dim = config["z_dim"]

    key = jax.random.PRNGKey(0)
    kp, k1, k2, k3 = jax.random.split(key, 4)
    params = init_params(kp, agg_dim, h_dim, z_dim)

    # 1) Single aggregated-r vector (the module's native call signature).
    r_single = jax.random.normal(k1, (agg_dim,), jnp.float32)
    mu_s, sg_s = jax.block_until_ready(r_to_z_forward(params, r_single))
    ref_mu_s, ref_sg_s = reference_forward(params, r_single)
    assert mu_s.shape == (z_dim,) and sg_s.shape == (z_dim,)
    assert jnp.allclose(mu_s, ref_mu_s, atol=1e-2, rtol=1e-2), \
        f"mu max abs err = {jnp.max(jnp.abs(mu_s - ref_mu_s))}"
    assert jnp.allclose(sg_s, ref_sg_s, atol=1e-2, rtol=1e-2), \
        f"sigma max abs err = {jnp.max(jnp.abs(sg_s - ref_sg_s))}"

    # 2) Small batch (grid-free, fully VMEM-resident path).
    r_small = jax.random.normal(k2, (8, agg_dim), jnp.float32)
    mu_sm, sg_sm = jax.block_until_ready(r_to_z_forward(params, r_small))
    ref_mu_sm, ref_sg_sm = reference_forward(params, r_small)
    assert jnp.allclose(mu_sm, ref_mu_sm, atol=1e-2, rtol=1e-2)
    assert jnp.allclose(sg_sm, ref_sg_sm, atol=1e-2, rtol=1e-2)

    # 3) Larger batch (grid over B, 128-row tiles, parallel axis, padding).
    B = 200
    r_batch = jax.random.normal(k3, (B, agg_dim), jnp.float32)
    mu_b, sg_b = jax.block_until_ready(r_to_z_forward(params, r_batch))
    ref_mu_b, ref_sg_b = reference_forward(params, r_batch)
    assert mu_b.shape == (B, z_dim) and sg_b.shape == (B, z_dim)
    assert jnp.allclose(mu_b, ref_mu_b, atol=1e-2, rtol=1e-2), \
        f"mu max abs err = {jnp.max(jnp.abs(mu_b - ref_mu_b))}"
    assert jnp.allclose(sg_b, ref_sg_b, atol=1e-2, rtol=1e-2), \
        f"sigma max abs err = {jnp.max(jnp.abs(sg_b - ref_sg_b))}"
    assert bool(jnp.all(sg_b > 0.09)) and bool(jnp.all(sg_b <= 1.0))

    print("KERNEL_OK")
</pallas_src>

<mosaic_0001>
module attributes {stable_mosaic.version = 11 : i64} {
  func.func @_r_to_z_kernel(%arg0: memref<1x128xf32, #tpu.memory_space<vmem>>, %arg1: memref<128x128xf32, #tpu.memory_space<vmem>>, %arg2: memref<1x128xf32, #tpu.memory_space<vmem>>, %arg3: memref<128x128xf32, #tpu.memory_space<vmem>>, %arg4: memref<1x128xf32, #tpu.memory_space<vmem>>, %arg5: memref<128x64xf32, #tpu.memory_space<vmem>>, %arg6: memref<1x64xf32, #tpu.memory_space<vmem>>, %arg7: memref<1x64xf32, #tpu.memory_space<vmem>>) attributes {dimension_semantics = [], scalar_prefetch = 0 : i64, scratch_operands = 0 : i64, tpu.core_type = #tpu.core_type<tc>} {
    %c0 = arith.constant 0 : index
    %c0_0 = arith.constant 0 : index
    %0 = vector.load %arg0[%c0, %c0_0] : memref<1x128xf32, #tpu.memory_space<vmem>>, vector<1x128xf32>
    %c0_1 = arith.constant 0 : index
    %c0_2 = arith.constant 0 : index
    %1 = vector.load %arg1[%c0_1, %c0_2] : memref<128x128xf32, #tpu.memory_space<vmem>>, vector<128x128xf32>
    %cst = arith.constant dense<0.000000e+00> : vector<1x128xf32>
    %2 = tpu.matmul %0, %1, %cst {dimension_numbers = #tpu.dot_dimension_numbers<[1], [0], [0], [1], [0, 0, 1, 1], [], []>} : vector<1x128xf32>, vector<128x128xf32>, vector<1x128xf32> -> vector<1x128xf32>
    %c0_3 = arith.constant 0 : index
    %c0_4 = arith.constant 0 : index
    %3 = vector.load %arg2[%c0_3, %c0_4] : memref<1x128xf32, #tpu.memory_space<vmem>>, vector<1x128xf32>
    %4 = arith.addf %2, %3 : vector<1x128xf32>
    %cst_5 = arith.constant 0.000000e+00 : f32
    %5 = vector.broadcast %cst_5 : f32 to vector<1x128xf32>
    %6 = arith.maximumf %4, %5 : vector<1x128xf32>
    %c0_6 = arith.constant 0 : index
    %c0_7 = arith.constant 0 : index
    %7 = vector.load %arg3[%c0_6, %c0_7] : memref<128x128xf32, #tpu.memory_space<vmem>>, vector<128x128xf32>
    %cst_8 = arith.constant dense<0.000000e+00> : vector<1x128xf32>
    %8 = tpu.matmul %6, %7, %cst_8 {dimension_numbers = #tpu.dot_dimension_numbers<[1], [0], [0], [1], [0, 0, 1, 1], [], []>} : vector<1x128xf32>, vector<128x128xf32>, vector<1x128xf32> -> vector<1x128xf32>
    %c0_9 = arith.constant 0 : index
    %c0_10 = arith.constant 0 : index
    %9 = vector.load %arg4[%c0_9, %c0_10] : memref<1x128xf32, #tpu.memory_space<vmem>>, vector<1x128xf32>
    %10 = arith.addf %8, %9 : vector<1x128xf32>
    %cst_11 = arith.constant 0.000000e+00 : f32
    %11 = vector.broadcast %cst_11 : f32 to vector<1x128xf32>
    %12 = arith.maximumf %10, %11 : vector<1x128xf32>
    %c0_12 = arith.constant 0 : index
    %c0_13 = arith.constant 0 : index
    %13 = vector.load %arg5[%c0_12, %c0_13] : memref<128x64xf32, #tpu.memory_space<vmem>>, vector<128x64xf32>
    %cst_14 = arith.constant dense<0.000000e+00> : vector<1x64xf32>
    %14 = tpu.matmul %12, %13, %cst_14 {dimension_numbers = #tpu.dot_dimension_numbers<[1], [0], [0], [1], [0, 0, 1, 1], [], []>} : vector<1x128xf32>, vector<128x64xf32>, vector<1x64xf32> -> vector<1x64xf32>
    %c0_15 = arith.constant 0 : index
    %c0_16 = arith.constant 0 : index
    %15 = vector.load %arg6[%c0_15, %c0_16] : memref<1x64xf32, #tpu.memory_space<vmem>>, vector<1x64xf32>
    %16 = arith.addf %14, %15 : vector<1x64xf32>
    %17 = arith.negf %16 : vector<1x64xf32>
    %18 = math.exp %17 : vector<1x64xf32>
    %cst_17 = arith.constant 1.000000e+00 : f32
    %19 = vector.broadcast %cst_17 : f32 to vector<1x64xf32>
    %20 = arith.addf %19, %18 : vector<1x64xf32>
    %21 = arith.divf %19, %20 : vector<1x64xf32>
    %cst_18 = arith.constant 0.899999976 : f32
    %22 = vector.broadcast %cst_18 : f32 to vector<1x64xf32>
    %23 = arith.mulf %22, %21 : vector<1x64xf32>
    %cst_19 = arith.constant 1.000000e-01 : f32
    %24 = vector.broadcast %cst_19 : f32 to vector<1x64xf32>
    %25 = arith.addf %24, %23 : vector<1x64xf32>
    %26 = tpu.iota {dimensions = array<i32: 1>} : vector<1x64xi32>
    %c32_i32 = arith.constant 32 : i32
    %27 = vector.broadcast %c32_i32 : i32 to vector<1x64xi32>
    %28 = arith.cmpi slt, %26, %27 : vector<1x64xi32>
    %29 = arith.select %28, %16, %25 : vector<1x64xi1>, vector<1x64xf32>
    %c0_20 = arith.constant 0 : index
    %c0_21 = arith.constant 0 : index
    %30 = vector.load %arg7[%c0_20, %c0_21] : memref<1x64xf32, #tpu.memory_space<vmem>>, vector<1x64xf32>
    tpu.vector_store %arg7[%c0_20, %c0_21], %29 {strides = array<i32>} : memref<1x64xf32, #tpu.memory_space<vmem>>, vector<1x64xf32>,
    return
  }
}

</mosaic_0001>

<llo_original>
// kernel: tpu_custom_call.1
$region0: #{tpu_custom_call.1}
  #allocation0 [shape = 'u32[]', space=smem, size = 0x4, offset = 0x4, fixed_abs, tag = 'smem constant byte address 0x4 - core index']
  #allocation1 [shape = 'u32[144,128]{1,0:T(1,128)}', space=vmem, size = 0x12000, scoped, tag = 'internal scratch']
  %s0 = inlined_call_operand.vmem [shape: f32[1,128], index: 0, kind: input, shape index: {}]
  %s1 = inlined_call_operand.vmem [shape: f32[128,128], index: 1, kind: input, shape index: {}]
  %s2 = inlined_call_operand.vmem [shape: f32[1,128], index: 2, kind: input, shape index: {}]
  %s3 = inlined_call_operand.hbm [shape: f32[128,128], index: 3, kind: input, shape index: {}]
  %s4 = inlined_call_operand.vmem [shape: f32[1,128], index: 4, kind: input, shape index: {}]
  %s5 = inlined_call_operand.vmem [shape: f32[128,64], index: 5, kind: input, shape index: {}]
  %s6 = inlined_call_operand.vmem [shape: f32[1,64], index: 6, kind: input, shape index: {}]
  %s7 = inlined_call_operand.hbm [shape: f32[1,64], index: 7, kind: output, shape index: {}]
  %s8 = sld [smem:[#allocation0]]
  $region42: #{tpu_custom_call.1} parent=0
    _
  %s10 = ssub.s32 1, %s8
  %s11 = scalar_select 0, %s10, %s8
  $region1: #{tpu_custom_call.1} parent=0
    #allocation2 [shape = 'u8[65536]{0}', space=vmem, size = 0x10000, scoped, tag = 'input window, operand 3, single buffered']
    #allocation3 [shape = 's32[1]{0}', space=sflag, size = 0x4, scoped, tag = 'scoped memory for tpu_custom_call.1']
    #allocation4 [shape = 's32[1]{0}', space=sflag, size = 0x4, scoped, tag = 'scoped memory for tpu_custom_call.1']
    #allocation5 [shape = 'u8[512]{0}', space=vmem, size = 0x400, scoped, tag = 'output window, operand 0, single buffered']
    %12 = vsyncpa [#allocation3], 0
    %13 = vsyncpa [#allocation4], 0
    // Predicated region
    $region2: #{tpu_custom_call.1} parent=1 // pred_check
      _
    $region3: #{tpu_custom_call.1} parent=1 // pred_check_branch
      %15 = sbr.rel (0) target = $region5
    $region4: #{tpu_custom_call.1} parent=1 // pred_region
      _
    $region5: #{tpu_custom_call.1} parent=1 // pred_fallthru
      _
    // Predicated region
    $region6: #{tpu_custom_call.1} parent=1 // pred_check
      _
    $region7: #{tpu_custom_call.1} parent=1 // pred_check_branch
      %17 = sbr.rel (0) target = $region9
    $region8: #{tpu_custom_call.1} parent=1 // pred_region
      _
    $region9: #{tpu_custom_call.1} parent=1 // pred_fallthru
      _
    // Predicated region
    $region10: #{tpu_custom_call.1} parent=1 // pred_check
      _
    $region11: #{tpu_custom_call.1} parent=1 // pred_check_branch
      %19 = sbr.rel (0) target = $region13
    $region12: #{tpu_custom_call.1} parent=1 // pred_region
      _
    $region13: #{tpu_custom_call.1} parent=1 // pred_fallthru
      _
    // Predicated region
    $region14: #{tpu_custom_call.1} parent=1 // pred_check
      _
    $region15: #{tpu_custom_call.1} parent=1 // pred_check_branch
      %21 = sbr.rel (0) target = $region17
    $region16: #{tpu_custom_call.1} parent=1 // pred_region
      %s23 = ssub.s32 2048, 2048
      %24 = vsyncadd [#allocation3], %s23
      %s25 = sshll.u32 [#allocation2], 4
      %s26 = int_to_ptr.vmem [resolvable:$true] %s25
      %31 = dma.hbm_to_vmem [thread:$0]  %s3, 2048, %s26, [#allocation3], 128, 128, 8
    $region17: #{tpu_custom_call.1} parent=1 // pred_fallthru
      _
    // Predicated region
    $region18: #{tpu_custom_call.1} parent=1 // pred_check
      _
    $region19: #{tpu_custom_call.1} parent=1 // pred_check_branch
      %33 = sbr.rel (0) target = $region21
    $region20: #{tpu_custom_call.1} parent=1 // pred_region
      _
    $region21: #{tpu_custom_call.1} parent=1 // pred_fallthru
      _
    // Predicated region
    $region22: #{tpu_custom_call.1} parent=1 // pred_check
      _
    $region23: #{tpu_custom_call.1} parent=1 // pred_check_branch
      %35 = sbr.rel (0) target = $region25
    $region24: #{tpu_custom_call.1} parent=1 // pred_region
      _
    $region25: #{tpu_custom_call.1} parent=1 // pred_fallthru
      _
    // Predicated region
    $region26: #{tpu_custom_call.1} parent=1 // pred_check
      _
    $region27: #{tpu_custom_call.1} parent=1 // pred_check_branch
      %37 = sbr.rel (0) target = $region29
    $region28: #{tpu_custom_call.1} parent=1 // pred_region
      _
    $region29: #{tpu_custom_call.1} parent=1 // pred_fallthru
      _
    // Predicated region
    $region30: #{tpu_custom_call.1} parent=1 // pred_check
      _
    $region31: #{tpu_custom_call.1} parent=1 // pred_check_branch
      %39 = sbr.rel (0) target = $region33
    $region32: #{tpu_custom_call.1} parent=1 // pred_region
      %40 = dma.done [#allocation3], 2048
    $region33: #{tpu_custom_call.1} parent=1 // pred_fallthru
      _
    %v41 = vld [vmem:[%s0] sm:$0x1]
    %v42 = vld [vmem:[%s1] sm:$0xff]
    %v43 = vld [vmem:[%s1 + $0x8] sm:$0xff]
    %v44 = vld [vmem:[%s1 + $0x10] sm:$0xff]
    %v45 = vld [vmem:[%s1 + $0x18] sm:$0xff]
    %v46 = vld [vmem:[%s1 + $0x20] sm:$0xff]
    %v47 = vld [vmem:[%s1 + $0x28] sm:$0xff]
    %v48 = vld [vmem:[%s1 + $0x30] sm:$0xff]
    %v49 = vld [vmem:[%s1 + $0x38] sm:$0xff]
    %v50 = vld [vmem:[%s1 + $0x40] sm:$0xff]
    %v51 = vld [vmem:[%s1 + $0x48] sm:$0xff]
    %v52 = vld [vmem:[%s1 + $0x50] sm:$0xff]
    %v53 = vld [vmem:[%s1 + $0x58] sm:$0xff]
    %v54 = vld [vmem:[%s1 + $0x60] sm:$0xff]
    %v55 = vld [vmem:[%s1 + $0x68] sm:$0xff]
    %v56 = vld [vmem:[%s1 + $0x70] sm:$0xff]
    %v57 = vld [vmem:[%s1 + $0x78] sm:$0xff]
    %v58 = vld [vmem:[%s2] sm:$0x1]
    %59 = vmatprep.subr.mxu0 0.0
    %60 = vmatpush1.msra.mxu0 %v57
    %61 = vmatprep.subr.mxu0 0.0
    %62 = vmatpush1.msra.mxu0 %v56
    %63 = vmatprep.subr.mxu0 0.0
    %64 = vmatpush1.msra.mxu0 %v55
    %65 = vmatprep.subr.mxu0 0.0
    %66 = vmatpush1.msra.mxu0 %v54
    %67 = vmatprep.subr.mxu0 0.0
    %68 = vmatpush1.msra.mxu0 %v53
    %69 = vmatprep.subr.mxu0 0.0
    %70 = vmatpush1.msra.mxu0 %v52
    %71 = vmatprep.subr.mxu0 0.0
    %72 = vmatpush1.msra.mxu0 %v51
    %73 = vmatprep.subr.mxu0 0.0
    %74 = vmatpush1.msra.mxu0 %v50
    %75 = vmatprep.subr.mxu0 0.0
    %76 = vmatpush1.msra.mxu0 %v49
    %77 = vmatprep.subr.mxu0 0.0
    %78 = vmatpush1.msra.mxu0 %v48
    %79 = vmatprep.subr.mxu0 0.0
    %80 = vmatpush1.msra.mxu0 %v47
    %81 = vmatprep.subr.mxu0 0.0
    %82 = vmatpush1.msra.mxu0 %v46
    %83 = vmatprep.subr.mxu0 0.0
    %84 = vmatpush1.msra.mxu0 %v45
    %85 = vmatprep.subr.mxu0 0.0
    %86 = vmatpush1.msra.mxu0 %v44
    %87 = vmatprep.subr.mxu0 0.0
    %88 = vmatpush1.msra.mxu0 %v43
    %89 = vmatprep.subr.mxu0 0.0
    %90 = vmatpush1.msra.mxu0 %v42
    %91 = vmatprep.subr.mxu0 0.0
    %92 = vmatpush2.msra.mxu0 0.0
    %93 = vmatprep.subr.mxu0 0.0
    %94 = vmatpush2.msra.mxu0 0.0
    %95 = vmatprep.subr.mxu0 0.0
    %96 = vmatpush2.msra.mxu0 0.0
    %97 = vmatprep.subr.mxu0 0.0
    %98 = vmatpush2.msra.mxu0 0.0
    %99 = vmatprep.subr.mxu0 0.0
    %100 = vmatpush2.msra.mxu0 0.0
    %101 = vmatprep.subr.mxu0 0.0
    %102 = vmatpush2.msra.mxu0 0.0
    %103 = vmatprep.subr.mxu0 0.0
    %104 = vmatpush2.msra.mxu0 0.0
    %105 = vmatprep.subr.mxu0 0.0
    %106 = vmatpush2.msra.mxu0 0.0
    %107 = vmatprep.subr.mxu0 0.0
    %108 = vmatpush2.msra.mxu0 0.0
    %109 = vmatprep.subr.mxu0 0.0
    %110 = vmatpush2.msra.mxu0 0.0
    %111 = vmatprep.subr.mxu0 0.0
    %112 = vmatpush2.msra.mxu0 0.0
    %113 = vmatprep.subr.mxu0 0.0
    %114 = vmatpush2.msra.mxu0 0.0
    %115 = vmatprep.subr.mxu0 0.0
    %116 = vmatpush2.msra.mxu0 0.0
    %117 = vmatprep.subr.mxu0 0.0
    %118 = vmatpush2.msra.mxu0 0.0
    %119 = vmatprep.subr.mxu0 0.0
    %120 = vmatpush2.msra.mxu0 0.0
    %121 = vmatprep.subr.mxu0 0.0
    %122 = vmatpush2.msra.mxu0 0.0
    %123 = vmatprep.mubr.f32.mxu0 0.0
    %124 = vmatmul.mubr.f32.gmra.mxu0 %v41
    %v125 = vpop.f32.mrf.mxu0
    %v126 = vadd.f32 %v58, %v125
    %v127 = vpop.f32.mrf.mxu0
    %128 = vdwg.mxu0
    %v129 = vmax.f32 %v126, 0.0
    %v130 = vld [vmem:[#allocation2] sm:$0xff]
    %v131 = vld [vmem:[#allocation2 + $0x8] sm:$0xff]
    %v132 = vld [vmem:[#allocation2 + $0x10] sm:$0xff]
    %v133 = vld [vmem:[#allocation2 + $0x18] sm:$0xff]
    %v134 = vld [vmem:[#allocation2 + $0x20] sm:$0xff]
    %v135 = vld [vmem:[#allocation2 + $0x28] sm:$0xff]
    %v136 = vld [vmem:[#allocation2 + $0x30] sm:$0xff]
    %v137 = vld [vmem:[#allocation2 + $0x38] sm:$0xff]
    %v138 = vld [vmem:[#allocation2 + $0x40] sm:$0xff]
    %v139 = vld [vmem:[#allocation2 + $0x48] sm:$0xff]
    %v140 = vld [vmem:[#allocation2 + $0x50] sm:$0xff]
    %v141 = vld [vmem:[#allocation2 + $0x58] sm:$0xff]
    %v142 = vld [vmem:[#allocation2 + $0x60] sm:$0xff]
    %v143 = vld [vmem:[#allocation2 + $0x68] sm:$0xff]
    %v144 = vld [vmem:[#allocation2 + $0x70] sm:$0xff]
    %v145 = vld [vmem:[#allocation2 + $0x78] sm:$0xff]
    %v146 = vld [vmem:[%s4] sm:$0x1]
    %147 = vmatprep.subr.mxu0 0.0
    %148 = vmatpush1.msra.mxu0 %v145
    %149 = vmatprep.subr.mxu0 0.0
    %150 = vmatpush1.msra.mxu0 %v144
    %151 = vmatprep.subr.mxu0 0.0
    %152 = vmatpush1.msra.mxu0 %v143
    %153 = vmatprep.subr.mxu0 0.0
    %154 = vmatpush1.msra.mxu0 %v142
    %155 = vmatprep.subr.mxu0 0.0
    %156 = vmatpush1.msra.mxu0 %v141
    %157 = vmatprep.subr.mxu0 0.0
    %158 = vmatpush1.msra.mxu0 %v140
    %159 = vmatprep.subr.mxu0 0.0
    %160 = vmatpush1.msra.mxu0 %v139
    %161 = vmatprep.subr.mxu0 0.0
    %162 = vmatpush1.msra.mxu0 %v138
    %163 = vmatprep.subr.mxu0 0.0
    %164 = vmatpush1.msra.mxu0 %v137
    %165 = vmatprep.subr.mxu0 0.0
    %166 = vmatpush1.msra.mxu0 %v136
    %167 = vmatprep.subr.mxu0 0.0
    %168 = vmatpush1.msra.mxu0 %v135
    %169 = vmatprep.subr.mxu0 0.0
    %170 = vmatpush1.msra.mxu0 %v134
    %171 = vmatprep.subr.mxu0 0.0
    %172 = vmatpush1.msra.mxu0 %v133
    %173 = vmatprep.subr.mxu0 0.0
    %174 = vmatpush1.msra.mxu0 %v132
    %175 = vmatprep.subr.mxu0 0.0
    %176 = vmatpush1.msra.mxu0 %v131
    %177 = vmatprep.subr.mxu0 0.0
    %178 = vmatpush1.msra.mxu0 %v130
    %179 = vmatprep.subr.mxu0 0.0
    %180 = vmatpush2.msra.mxu0 0.0
    %181 = vmatprep.subr.mxu0 0.0
    %182 = vmatpush2.msra.mxu0 0.0
    %183 = vmatprep.subr.mxu0 0.0
    %184 = vmatpush2.msra.mxu0 0.0
    %185 = vmatprep.subr.mxu0 0.0
    %186 = vmatpush2.msra.mxu0 0.0
    %187 = vmatprep.subr.mxu0 0.0
    %188 = vmatpush2.msra.mxu0 0.0
    %189 = vmatprep.subr.mxu0 0.0
    %190 = vmatpush2.msra.mxu0 0.0
    %191 = vmatprep.subr.mxu0 0.0
    %192 = vmatpush2.msra.mxu0 0.0
    %193 = vmatprep.subr.mxu0 0.0
    %194 = vmatpush2.msra.mxu0 0.0
    %195 = vmatprep.subr.mxu0 0.0
    %196 = vmatpush2.msra.mxu0 0.0
    %197 = vmatprep.subr.mxu0 0.0
    %198 = vmatpush2.msra.mxu0 0.0
    %199 = vmatprep.subr.mxu0 0.0
    %200 = vmatpush2.msra.mxu0 0.0
    %201 = vmatprep.subr.mxu0 0.0
    %202 = vmatpush2.msra.mxu0 0.0
    %203 = vmatprep.subr.mxu0 0.0
    %204 = vmatpush2.msra.mxu0 0.0
    %205 = vmatprep.subr.mxu0 0.0
    %206 = vmatpush2.msra.mxu0 0.0
    %207 = vmatprep.subr.mxu0 0.0
    %208 = vmatpush2.msra.mxu0 0.0
    %209 = vmatprep.subr.mxu0 0.0
    %210 = vmatpush2.msra.mxu0 0.0
    %211 = vmatprep.mubr.f32.mxu0 0.0
    %212 = vmatmul.mubr.f32.gmra.mxu0 %v129
    %v213 = vpop.f32.mrf.mxu0
    %v214 = vadd.f32 %v146, %v213
    %v215 = vpop.f32.mrf.mxu0
    %216 = vdwg.mxu0
    %v217 = vmax.f32 %v214, 0.0
    %v218 = vld [vmem:[%s5] sm:$0xff]
    %v219 = vld [vmem:[%s5 + $0x8] sm:$0xff]
    %v220 = vld [vmem:[%s5 + $0x10] sm:$0xff]
    %v221 = vld [vmem:[%s5 + $0x18] sm:$0xff]
    %v222 = vld [vmem:[%s5 + $0x20] sm:$0xff]
    %v223 = vld [vmem:[%s5 + $0x28] sm:$0xff]
    %v224 = vld [vmem:[%s5 + $0x30] sm:$0xff]
    %v225 = vld [vmem:[%s5 + $0x38] sm:$0xff]
    %v226 = vld [vmem:[%s5 + $0x40] sm:$0xff]
    %v227 = vld [vmem:[%s5 + $0x48] sm:$0xff]
    %v228 = vld [vmem:[%s5 + $0x50] sm:$0xff]
    %v229 = vld [vmem:[%s5 + $0x58] sm:$0xff]
    %v230 = vld [vmem:[%s5 + $0x60] sm:$0xff]
    %v231 = vld [vmem:[%s5 + $0x68] sm:$0xff]
    %v232 = vld [vmem:[%s5 + $0x70] sm:$0xff]
    %v233 = vld [vmem:[%s5 + $0x78] sm:$0xff]
    %v234 = vld [vmem:[%s6] sm:$0x1]
    %235 = vmatprep.subr.mxu0 0.0
    %236 = vmatpush1.msra.mxu0 %v233
    %237 = vmatprep.subr.mxu0 0.0
    %238 = vmatpush1.msra.mxu0 %v232
    %239 = vmatprep.subr.mxu0 0.0
    %240 = vmatpush1.msra.mxu0 %v231
    %241 = vmatprep.subr.mxu0 0.0
    %242 = vmatpush1.msra.mxu0 %v230
    %243 = vmatprep.subr.mxu0 0.0
    %244 = vmatpush1.msra.mxu0 %v229
    %245 = vmatprep.subr.mxu0 0.0
    %246 = vmatpush1.msra.mxu0 %v228
    %247 = vmatprep.subr.mxu0 0.0
    %248 = vmatpush1.msra.mxu0 %v227
    %249 = vmatprep.subr.mxu0 0.0
    %250 = vmatpush1.msra.mxu0 %v226
    %251 = vmatprep.subr.mxu0 0.0
    %252 = vmatpush1.msra.mxu0 %v225
    %253 = vmatprep.subr.mxu0 0.0
    %254 = vmatpush1.msra.mxu0 %v224
    %255 = vmatprep.subr.mxu0 0.0
    %256 = vmatpush1.msra.mxu0 %v223
    %257 = vmatprep.subr.mxu0 0.0
    %258 = vmatpush1.msra.mxu0 %v222
    %259 = vmatprep.subr.mxu0 0.0
    %260 = vmatpush1.msra.mxu0 %v221
    %261 = vmatprep.subr.mxu0 0.0
    %262 = vmatpush1.msra.mxu0 %v220
    %263 = vmatprep.subr.mxu0 0.0
    %264 = vmatpush1.msra.mxu0 %v219
    %265 = vmatprep.subr.mxu0 0.0
    %266 = vmatpush1.msra.mxu0 %v218
    %267 = vmatprep.subr.mxu0 0.0
    %268 = vmatpush2.msra.mxu0 0.0
    %269 = vmatprep.subr.mxu0 0.0
    %270 = vmatpush2.msra.mxu0 0.0
    %271 = vmatprep.subr.mxu0 0.0
    %272 = vmatpush2.msra.mxu0 0.0
    %273 = vmatprep.subr.mxu0 0.0
    %274 = vmatpush2.msra.mxu0 0.0
    %275 = vmatprep.subr.mxu0 0.0
    %276 = vmatpush2.msra.mxu0 0.0
    %277 = vmatprep.subr.mxu0 0.0
    %278 = vmatpush2.msra.mxu0 0.0
    %279 = vmatprep.subr.mxu0 0.0
    %280 = vmatpush2.msra.mxu0 0.0
    %281 = vmatprep.subr.mxu0 0.0
    %282 = vmatpush2.msra.mxu0 0.0
    %283 = vmatprep.subr.mxu0 0.0
    %284 = vmatpush2.msra.mxu0 0.0
    %285 = vmatprep.subr.mxu0 0.0
    %286 = vmatpush2.msra.mxu0 0.0
    %287 = vmatprep.subr.mxu0 0.0
    %288 = vmatpush2.msra.mxu0 0.0
    %289 = vmatprep.subr.mxu0 0.0
    %290 = vmatpush2.msra.mxu0 0.0
    %291 = vmatprep.subr.mxu0 0.0
    %292 = vmatpush2.msra.mxu0 0.0
    %293 = vmatprep.subr.mxu0 0.0
    %294 = vmatpush2.msra.mxu0 0.0
    %295 = vmatprep.subr.mxu0 0.0
    %296 = vmatpush2.msra.mxu0 0.0
    %297 = vmatprep.subr.mxu0 0.0
    %298 = vmatpush2.msra.mxu0 0.0
    %299 = vmatprep.mubr.f32.mxu0 0.0
    %300 = vmatmul.mubr.f32.gmra.mxu0 %v217
    %v301 = vpop.f32.mrf.mxu0
    %v302 = vadd.f32 %v234, %v301
    %v303 = vpop.f32.mrf.mxu0
    %304 = vdwg.mxu0
    %v305 = vxor.u32 %v302, 2147483648
    %v306 = vmul.f32 %v305, 1.442695
    %v307 = vpow.pop %v306
    %v308 = vadd.f32 %v307, 1.0
    %v309 = vrcp.pop %v308
    %v310 = vmul.f32 1.0, %v309
    %v311 = vmul.f32 %v310, 0.9
    %v312 = vadd.f32 %v311, 0.1
    %v313 = vlaneseq
    %v314 = vand.u32 %v313, 127
    %vm315 = vcmp.lt.s32.totalorder %v314, 32
    %v316 = vsel %vm315, %v302, %v312
    %vm317 = vcmask 516096
    %318 = vst.msk [vmem:[#allocation5] sm:$0x1] %vm317, %v316
    // Predicated region
    $region34: #{tpu_custom_call.1} parent=1 // pred_check
      _
    $region35: #{tpu_custom_call.1} parent=1 // pred_check_branch
      %320 = sbr.rel (0) target = $region37
    $region36: #{tpu_custom_call.1} parent=1 // pred_region
      %s322 = ssub.s32 16, 16
      %323 = vsyncadd [#allocation4], %s322
      %s325 = sshll.u32 [#allocation5], 4
      %s326 = int_to_ptr.vmem [resolvable:$true] %s325
      %328 = dma.vmem_to_hbm [thread:$0]  %s326, 16, %s7, [#allocation4]
    $region37: #{tpu_custom_call.1} parent=1 // pred_fallthru
      _
    // Predicated region
    $region38: #{tpu_custom_call.1} parent=1 // pred_check
      _
    $region39: #{tpu_custom_call.1} parent=1 // pred_check_branch
      %330 = sbr.rel (0) target = $region41
    $region40: #{tpu_custom_call.1} parent=1 // pred_region
      %331 = dma.done [#allocation4], 16
    $region41: #{tpu_custom_call.1} parent=1 // pred_fallthru
      _
    %332 = vsyncpa [#allocation3], 1
    %333 = vsyncpa [#allocation4], 1

</llo_original>
